<compile_context>
chip_gen: v7x
topology: tpu7x:2x2x1
jax: 0.10.0
libtpu: 0.0.40
codegen_flags: <defaults>
</compile_context>

<pallas_src>
import math
from functools import partial

import jax
import jax.numpy as jnp
from jax import lax
from jax.experimental import pallas as pl
from jax.experimental.pallas import tpu as pltpu


def _round_up(v, mult):
    return ((v + mult - 1) // mult) * mult


def _margin_kernel(x_ref, xn_ref, ixn_ref, w_ref, wn_ref, iwn_ref,
                   xw_ref, fm_ref, *, m, coefs, cos_thresholds):
    # x_ref  : (tb, D)   pre-scaled features (bf16/f32 MXU stream)
    # w_ref  : (tc, D)   pre-scaled weight tile, NOT transposed
    # xn/ixn : (tb, 1)   f32  ||x||, 1/||x||   (hoisted to wrapper)
    # wn/iwn : (1, tc)   f32  ||w||, 1/||w||   (hoisted to wrapper)
    # NT matmul: contract D with D, f32 accumulation on the MXU.
    xw = lax.dot_general(x_ref[...], w_ref[...],
                         dimension_numbers=(((1,), (1,)), ((), ())),
                         preferred_element_type=jnp.float32)          # (tb, tc)

    # (xw * inv_x) * inv_w avoids the (tb, tc) inv_x*inv_w outer-product temp.
    cos_t = jnp.clip((xw * ixn_ref[...]) * iwn_ref[...], -1.0, 1.0)

    # k = floor(m * arccos(cos_t) / pi) without arccos:
    #   theta >= i*pi/m  <=>  cos_t <= cos(i*pi/m)   (nested thresholds)
    k = jnp.zeros_like(cos_t)
    for thr in cos_thresholds:                                # m selects total
        k = k + jnp.where(cos_t <= thr, 1.0, 0.0)
    half = k * 0.5
    sign_k = 1.0 - 4.0 * (half - jnp.floor(half))             # (-1)^k via parity

    # cos(m*theta) = sum_n (-1)^n C(m,2n) cos^(m-2n) sin^(2n)
    # with reused power tables (O(m) multiplies, no ones-broadcast).
    cos_sq = cos_t * cos_t
    sin_sq = 1.0 - cos_sq
    half_m = m // 2

    def pow_table(base, max_p):
        tbl = [None]                                          # [0] -> implicit 1.0
        if max_p >= 1:
            tbl.append(base)
            for _ in range(2, max_p + 1):
                tbl.append(tbl[-1] * base)
        return tbl

    cs = pow_table(cos_sq, half_m)
    sn = pow_table(sin_sq, half_m)
    cos_m_t = None
    for n in range(half_m + 1):
        cp, sp = cs[half_m - n], sn[n]
        if cp is None:
            term = coefs[n] * sp
        elif sp is None:
            term = coefs[n] * cp
        else:
            term = coefs[n] * (cp * sp)
        cos_m_t = term if cos_m_t is None else cos_m_t + term
    if m % 2 == 1:
        cos_m_t = cos_m_t * cos_t

    phi = sign_k * cos_m_t - 2.0 * k
    xw_ref[...] = xw.astype(xw_ref.dtype)
    # (phi * ||x||) * ||w|| keeps a single live (tb, tc) temporary.
    fm_ref[...] = ((phi * xn_ref[...]) * wn_ref[...]).astype(fm_ref.dtype)


def multiplicative_angular_margin_linear(x, weight, *, m, weight_scale,
                                         feature_scale, tb=256, tc=1024,
                                         mxu_dtype=jnp.bfloat16,
                                         out_dtype=jnp.float32):
    """Returns (x @ w.T, f_m). Requires integer m > 1.

    tb, tc    : batch / out-channel tile requests (auto-shrunk to VMEM budget).
    mxu_dtype : dtype of the x / weight MXU streams (bf16 = fast path on TPU).
    out_dtype : dtype of the two (B, C) outputs (bf16 halves output HBM bytes).
    """
    assert isinstance(m, int) and m > 1
    B, D = x.shape
    C, D2 = weight.shape
    assert D == D2

    # --- glue: weight / feature scaling branches (parameter preprocessing) ---
    w = weight.astype(jnp.float32)
    x = x.astype(jnp.float32)
    if weight_scale:
        w = w / jnp.sqrt(jnp.sum(w * w, axis=1, keepdims=True))
        if weight_scale != 1:
            w = w * weight_scale
    if feature_scale:
        # TODO(synk): original forward is `pass`; feature_scale normalizes x by
        # its own row norms here (the earlier draft divided by the (C,1) weight
        # norms, which only broadcasts when C == B).
        x = x / jnp.sqrt(jnp.sum(x * x, axis=1, keepdims=True))
        if feature_scale != 1:
            x = x * feature_scale

    # Hoisted norms: computed once here instead of per batch/C tile in-kernel.
    x_norm = jnp.sqrt(jnp.sum(x * x, axis=1, keepdims=True))        # (B, 1)
    w_norm = jnp.sqrt(jnp.sum(w * w, axis=1, keepdims=True)).T      # (1, C)
    inv_x_norm = 1.0 / x_norm
    inv_w_norm = 1.0 / w_norm

    # --- tile-size / padding selection (lane-dense MXU tiles) ---
    in_itm = jnp.dtype(mxu_dtype).itemsize
    out_itm = jnp.dtype(out_dtype).itemsize
    sub = {4: 8, 2: 16, 1: 32}.get(in_itm, 8)      # sublane pack of mxu_dtype

    b_base = _round_up(B, sub)
    tb_eff = _round_up(min(tb, b_base), sub)
    c_base = _round_up(C, 128)                     # always lane-dense, even C<128
    tc_eff = _round_up(min(tc, c_base), 128)

    # Weight tile single-buffered when the unblocked contraction dim is large
    # (it only changes on the outer C axis, so the exposed DMA amortizes over
    # the inner batch loop).  Alternative: K(D) grid axis + f32 accumulator.
    w_bufs = 1 if D >= 2048 else 2

    def _vmem_need(tb_, tc_):
        need = 2 * tb_ * D * in_itm                # x tile, double-buffered
        need += w_bufs * tc_ * D * in_itm          # weight tile
        need += 2 * (2 * tb_ + 2 * tc_) * 4        # norm strips
        need += 2 * 2 * tb_ * tc_ * out_itm        # two outputs, double-buffered
        need += 4 * tb_ * tc_ * 4                  # epilogue f32 temporaries
        return need

    # v7x has only 64 MiB VMEM per TensorCore: budget tiles to <= 44 MiB (or
    # 70% of the physical capacity if smaller) so Mosaic scratch always fits.
    try:
        phys_vmem = int(pltpu.get_tpu_info().vmem_capacity_bytes)
    except Exception:
        phys_vmem = 64 << 20                       # assume worst case (v7x)
    budget = min(44 << 20, int(0.70 * phys_vmem))

    while tc_eff > 128 and _vmem_need(tb_eff, tc_eff) > budget:
        tc_eff = max(128, _round_up(tc_eff // 2, 128))
    while tb_eff > sub and _vmem_need(tb_eff, tc_eff) > budget:
        tb_eff = max(sub, _round_up(tb_eff // 2, sub))

    b_pad = _round_up(B, tb_eff)
    c_pad = _round_up(C, tc_eff)

    # Weight stays (C, D): no wrapper-side transpose materialization.
    x_p = jnp.pad(x, ((0, b_pad - B), (0, 0))).astype(mxu_dtype)
    w_p = jnp.pad(w, ((0, c_pad - C), (0, 0))).astype(mxu_dtype)
    # Pad norms with 1.0 so padded rows/cols never produce NaN/Inf.
    xn_p = jnp.pad(x_norm, ((0, b_pad - B), (0, 0)), constant_values=1.0)
    ixn_p = jnp.pad(inv_x_norm, ((0, b_pad - B), (0, 0)), constant_values=1.0)
    wn_p = jnp.pad(w_norm, ((0, 0), (0, c_pad - C)), constant_values=1.0)
    iwn_p = jnp.pad(inv_w_norm, ((0, 0), (0, c_pad - C)), constant_values=1.0)

    coefs = tuple(((-1.0) ** n) * math.comb(m, 2 * n) for n in range(m // 2 + 1))
    cos_thresholds = tuple(math.cos(i * math.pi / m) for i in range(1, m + 1))

    kernel = partial(_margin_kernel, m=m, coefs=coefs,
                     cos_thresholds=cos_thresholds)

    n_b = b_pad // tb_eff
    n_c = c_pad // tc_eff

    vmem_limit = int(min(56 << 20,
                         max(16 << 20, _vmem_need(tb_eff, tc_eff) + (8 << 20))))

    cost = pl.CostEstimate(
        flops=2 * b_pad * D * c_pad
        + b_pad * c_pad * (3 * m + 2 * (m // 2) + 16),
        transcendentals=0,
        bytes_accessed=n_c * b_pad * D * in_itm        # x re-read per C tile
        + c_pad * D * in_itm                           # weight read once
        + n_c * 2 * b_pad * 4 + 2 * c_pad * 4          # norm strips
        + 2 * b_pad * c_pad * out_itm,                 # two outputs
    )

    w_spec_kwargs = {}
    if w_bufs == 1:
        w_spec_kwargs["pipeline_mode"] = pl.Buffered(1)
    w_spec = pl.BlockSpec((tc_eff, D), lambda j, i: (j, 0), **w_spec_kwargs)

    # Grid: C tiles outer, batch tiles inner -> the (large) weight tile stays
    # VMEM-resident across the inner batch loop; only the small x tile streams.
    xw, fm = pl.pallas_call(
        kernel,
        out_shape=(jax.ShapeDtypeStruct((b_pad, c_pad), out_dtype),
                   jax.ShapeDtypeStruct((b_pad, c_pad), out_dtype)),
        grid_spec=pltpu.PrefetchScalarGridSpec(
            num_scalar_prefetch=0,
            grid=(n_c, n_b),
            in_specs=[
                pl.BlockSpec((tb_eff, D), lambda j, i: (i, 0)),      # x
                pl.BlockSpec((tb_eff, 1), lambda j, i: (i, 0)),      # ||x||
                pl.BlockSpec((tb_eff, 1), lambda j, i: (i, 0)),      # 1/||x||
                w_spec,                                              # w (C, D)
                pl.BlockSpec((1, tc_eff), lambda j, i: (0, j)),      # ||w||
                pl.BlockSpec((1, tc_eff), lambda j, i: (0, j)),      # 1/||w||
            ],
            out_specs=[
                pl.BlockSpec((tb_eff, tc_eff), lambda j, i: (i, j)),
                pl.BlockSpec((tb_eff, tc_eff), lambda j, i: (i, j)),
            ],
        ),
        compiler_params=pltpu.CompilerParams(
            # Megacore (v7x) split lands on the outer C axis: each core reads a
            # disjoint slice of the weight instead of re-streaming all of it.
            dimension_semantics=("parallel", "arbitrary"),
            vmem_limit_bytes=vmem_limit),
        cost_estimate=cost,
    )(x_p, xn_p, ixn_p, w_p, wn_p, iwn_p)

    return xw[:B, :C], fm[:B, :C]


def _reference(x, weight, m, weight_scale, feature_scale):
    """Pure-JAX reference mirroring the forward (arccos/floor path)."""
    w = weight.astype(jnp.float32)
    x = x.astype(jnp.float32)
    if weight_scale:
        w = w / jnp.sqrt(jnp.sum(w * w, axis=1, keepdims=True))
        if weight_scale != 1:
            w = w * weight_scale
    if feature_scale:
        x = x / jnp.sqrt(jnp.sum(x * x, axis=1, keepdims=True))
        if feature_scale != 1:
            x = x * feature_scale
    xw = x @ w.T
    w_norm = jnp.sqrt(jnp.sum(w * w, axis=1))
    x_norm = jnp.sqrt(jnp.sum(x * x, axis=1))
    cos_t = jnp.clip(xw / (x_norm[:, None] * w_norm[None, :]), -1.0, 1.0)
    angle = jnp.arccos(cos_t)
    k = jnp.floor(m * angle / math.pi)
    sin_sq = 1.0 - cos_t * cos_t
    cos_m = jnp.zeros_like(cos_t)
    for i in range(m // 2 + 1):
        coef = ((-1.0) ** i) * (math.factorial(m) / math.factorial(2 * i)
                                / math.factorial(m - 2 * i))
        cos_m = cos_m + coef * (cos_t ** (m - 2 * i)) * (sin_sq ** i)
    sign_k = jnp.where(jnp.mod(k, 2.0) == 0, 1.0, -1.0)
    phi = sign_k * cos_m - 2.0 * k
    fm = phi * x_norm[:, None] * w_norm[None, :]
    return xw, fm


if __name__ == "__main__":
    key = jax.random.PRNGKey(0)

    def make_case(B, Din, Cout, case_key):
        kx, kw = jax.random.split(case_key)
        x = jax.random.normal(kx, (B, Din), dtype=jnp.float32)
        # xavier_normal_ on a (Cout, Din) weight: std = sqrt(2 / (fan_in+fan_out))
        std = math.sqrt(2.0 / (Din + Cout))
        weight = std * jax.random.normal(kw, (Cout, Din), dtype=jnp.float32)
        return x, weight

    k1, k2, k3 = jax.random.split(key, 3)

    # Case 1: tiny shapes, C < 128 (padded to one full 128-lane tile), even m.
    x, w = make_case(16, 32, 16, k1)
    xw, fm = multiplicative_angular_margin_linear(
        x, w, m=4, weight_scale=1, feature_scale=0, mxu_dtype=jnp.float32)
    jax.block_until_ready((xw, fm))
    xw_r, fm_r = _reference(x, w, 4, 1, 0)
    assert jnp.allclose(xw, xw_r, rtol=1e-4, atol=1e-4)
    assert jnp.allclose(fm, fm_r, rtol=1e-4, atol=1e-4)

    # Case 2: two 128-wide C tiles, odd m, weight_scale=2, exact f32 MXU path.
    x, w = make_case(32, 64, 256, k2)
    xw, fm = multiplicative_angular_margin_linear(
        x, w, m=3, weight_scale=2, feature_scale=0, mxu_dtype=jnp.float32)
    jax.block_until_ready((xw, fm))
    xw_r, fm_r = _reference(x, w, 3, 2, 0)
    assert jnp.allclose(xw, xw_r, rtol=1e-4, atol=1e-4)
    assert jnp.allclose(fm, fm_r, rtol=1e-4, atol=1e-4)

    # Case 3: default bf16 MXU streams (the fast TPU path).  bf16 rounding can
    # flip the integer k near the cos(i*pi/m) thresholds (phi jumps by 2), so
    # only xw is tolerance-checked; fm is checked for finiteness.
    x, w = make_case(32, 64, 256, k3)
    xw, fm = multiplicative_angular_margin_linear(
        x, w, m=4, weight_scale=1, feature_scale=0)
    jax.block_until_ready((xw, fm))
    xw_r, _ = _reference(x, w, 4, 1, 0)
    scale = jnp.max(jnp.abs(xw_r))
    assert float(jnp.max(jnp.abs(xw - xw_r))) <= 2e-2 * float(scale)
    assert bool(jnp.all(jnp.isfinite(fm)))

    print("KERNEL_OK")
</pallas_src>

<mosaic_0001>
module attributes {stable_mosaic.version = 11 : i64} {
  func.func @_margin_kernel(%arg0: i32, %arg1: i32, %arg2: memref<16x32xf32, #tpu.memory_space<vmem>>, %arg3: memref<16x1xf32, #tpu.memory_space<vmem>>, %arg4: memref<16x1xf32, #tpu.memory_space<vmem>>, %arg5: memref<128x32xf32, #tpu.memory_space<vmem>>, %arg6: memref<1x128xf32, #tpu.memory_space<vmem>>, %arg7: memref<1x128xf32, #tpu.memory_space<vmem>>, %arg8: memref<16x128xf32, #tpu.memory_space<vmem>>, %arg9: memref<16x128xf32, #tpu.memory_space<vmem>>) attributes {dimension_semantics = [#tpu.dimension_semantics<parallel>, #tpu.dimension_semantics<arbitrary>], iteration_bounds = array<i64: 1, 1>, scalar_prefetch = 0 : i64, scratch_operands = 0 : i64, tpu.core_type = #tpu.core_type<tc>, window_params = [{transform_indices = @transform_0, window_bounds = array<i64: 16, 32>}, {transform_indices = @transform_1, window_bounds = array<i64: 16, 1>}, {transform_indices = @transform_2, window_bounds = array<i64: 16, 1>}, {transform_indices = @transform_3, window_bounds = array<i64: 128, 32>}, {transform_indices = @transform_4, window_bounds = array<i64: 1, 128>}, {transform_indices = @transform_5, window_bounds = array<i64: 1, 128>}, {transform_indices = @transform_6, window_bounds = array<i64: 16, 128>}, {transform_indices = @transform_7, window_bounds = array<i64: 16, 128>}]} {
    %c0 = arith.constant 0 : index
    %c0_0 = arith.constant 0 : index
    %0 = vector.load %arg2[%c0, %c0_0] : memref<16x32xf32, #tpu.memory_space<vmem>>, vector<16x32xf32>
    %c0_1 = arith.constant 0 : index
    %c0_2 = arith.constant 0 : index
    %1 = vector.load %arg5[%c0_1, %c0_2] : memref<128x32xf32, #tpu.memory_space<vmem>>, vector<128x32xf32>
    %cst = arith.constant dense<0.000000e+00> : vector<16x128xf32>
    %2 = tpu.matmul %0, %1, %cst {dimension_numbers = #tpu.dot_dimension_numbers<[1], [1], [0], [0], [0, 0, 1, 0], [], []>} : vector<16x32xf32>, vector<128x32xf32>, vector<16x128xf32> -> vector<16x128xf32>
    %c0_3 = arith.constant 0 : index
    %c0_4 = arith.constant 0 : index
    %3 = vector.load %arg4[%c0_3, %c0_4] : memref<16x1xf32, #tpu.memory_space<vmem>>, vector<16x1xf32>
    %4 = vector.broadcast %3 : vector<16x1xf32> to vector<16x128xf32>
    %5 = arith.mulf %2, %4 : vector<16x128xf32>
    %c0_5 = arith.constant 0 : index
    %c0_6 = arith.constant 0 : index
    %6 = vector.load %arg7[%c0_5, %c0_6] : memref<1x128xf32, #tpu.memory_space<vmem>>, vector<1x128xf32>
    %7 = vector.broadcast %6 : vector<1x128xf32> to vector<16x128xf32>
    %8 = arith.mulf %5, %7 : vector<16x128xf32>
    %cst_7 = arith.constant -1.000000e+00 : f32
    %cst_8 = arith.constant 1.000000e+00 : f32
    %9 = vector.broadcast %cst_7 : f32 to vector<16x128xf32>
    %10 = arith.maximumf %9, %8 : vector<16x128xf32>
    %11 = vector.broadcast %cst_8 : f32 to vector<16x128xf32>
    %12 = arith.minimumf %11, %10 : vector<16x128xf32>
    %cst_9 = arith.constant 0.000000e+00 : f32
    %13 = vector.broadcast %cst_9 : f32 to vector<16x128xf32>
    %cst_10 = arith.constant 0.707106769 : f32
    %14 = vector.broadcast %cst_10 : f32 to vector<16x128xf32>
    %15 = arith.cmpf ole, %12, %14 : vector<16x128xf32>
    %cst_11 = arith.constant 1.000000e+00 : f32
    %cst_12 = arith.constant 0.000000e+00 : f32
    %16 = vector.broadcast %cst_11 : f32 to vector<16x128xf32>
    %17 = vector.broadcast %cst_12 : f32 to vector<16x128xf32>
    %18 = arith.select %15, %16, %17 : vector<16x128xi1>, vector<16x128xf32>
    %19 = arith.addf %13, %18 : vector<16x128xf32>
    %cst_13 = arith.constant 6.12323426E-17 : f32
    %20 = vector.broadcast %cst_13 : f32 to vector<16x128xf32>
    %21 = arith.cmpf ole, %12, %20 : vector<16x128xf32>
    %cst_14 = arith.constant 1.000000e+00 : f32
    %cst_15 = arith.constant 0.000000e+00 : f32
    %22 = vector.broadcast %cst_14 : f32 to vector<16x128xf32>
    %23 = vector.broadcast %cst_15 : f32 to vector<16x128xf32>
    %24 = arith.select %21, %22, %23 : vector<16x128xi1>, vector<16x128xf32>
    %25 = arith.addf %19, %24 : vector<16x128xf32>
    %cst_16 = arith.constant -0.707106769 : f32
    %26 = vector.broadcast %cst_16 : f32 to vector<16x128xf32>
    %27 = arith.cmpf ole, %12, %26 : vector<16x128xf32>
    %cst_17 = arith.constant 1.000000e+00 : f32
    %cst_18 = arith.constant 0.000000e+00 : f32
    %28 = vector.broadcast %cst_17 : f32 to vector<16x128xf32>
    %29 = vector.broadcast %cst_18 : f32 to vector<16x128xf32>
    %30 = arith.select %27, %28, %29 : vector<16x128xi1>, vector<16x128xf32>
    %31 = arith.addf %25, %30 : vector<16x128xf32>
    %cst_19 = arith.constant -1.000000e+00 : f32
    %32 = vector.broadcast %cst_19 : f32 to vector<16x128xf32>
    %33 = arith.cmpf ole, %12, %32 : vector<16x128xf32>
    %cst_20 = arith.constant 1.000000e+00 : f32
    %cst_21 = arith.constant 0.000000e+00 : f32
    %34 = vector.broadcast %cst_20 : f32 to vector<16x128xf32>
    %35 = vector.broadcast %cst_21 : f32 to vector<16x128xf32>
    %36 = arith.select %33, %34, %35 : vector<16x128xi1>, vector<16x128xf32>
    %37 = arith.addf %31, %36 : vector<16x128xf32>
    %cst_22 = arith.constant 5.000000e-01 : f32
    %38 = vector.broadcast %cst_22 : f32 to vector<16x128xf32>
    %39 = arith.mulf %37, %38 : vector<16x128xf32>
    %40 = math.floor %39 : vector<16x128xf32>
    %41 = arith.subf %39, %40 : vector<16x128xf32>
    %cst_23 = arith.constant 4.000000e+00 : f32
    %42 = vector.broadcast %cst_23 : f32 to vector<16x128xf32>
    %43 = arith.mulf %42, %41 : vector<16x128xf32>
    %cst_24 = arith.constant 1.000000e+00 : f32
    %44 = vector.broadcast %cst_24 : f32 to vector<16x128xf32>
    %45 = arith.subf %44, %43 : vector<16x128xf32>
    %46 = arith.mulf %12, %12 : vector<16x128xf32>
    %cst_25 = arith.constant 1.000000e+00 : f32
    %47 = vector.broadcast %cst_25 : f32 to vector<16x128xf32>
    %48 = arith.subf %47, %46 : vector<16x128xf32>
    %49 = arith.mulf %46, %46 : vector<16x128xf32>
    %50 = arith.mulf %48, %48 : vector<16x128xf32>
    %cst_26 = arith.constant 1.000000e+00 : f32
    %51 = vector.broadcast %cst_26 : f32 to vector<16x128xf32>
    %52 = arith.mulf %51, %49 : vector<16x128xf32>
    %53 = arith.mulf %46, %48 : vector<16x128xf32>
    %cst_27 = arith.constant -6.000000e+00 : f32
    %54 = vector.broadcast %cst_27 : f32 to vector<16x128xf32>
    %55 = arith.mulf %54, %53 : vector<16x128xf32>
    %56 = arith.addf %52, %55 : vector<16x128xf32>
    %cst_28 = arith.constant 1.000000e+00 : f32
    %57 = vector.broadcast %cst_28 : f32 to vector<16x128xf32>
    %58 = arith.mulf %57, %50 : vector<16x128xf32>
    %59 = arith.addf %56, %58 : vector<16x128xf32>
    %60 = arith.mulf %45, %59 : vector<16x128xf32>
    %cst_29 = arith.constant 2.000000e+00 : f32
    %61 = vector.broadcast %cst_29 : f32 to vector<16x128xf32>
    %62 = arith.mulf %61, %37 : vector<16x128xf32>
    %63 = arith.subf %60, %62 : vector<16x128xf32>
    %c0_30 = arith.constant 0 : index
    %c0_31 = arith.constant 0 : index
    %64 = vector.load %arg8[%c0_30, %c0_31] : memref<16x128xf32, #tpu.memory_space<vmem>>, vector<16x128xf32>
    tpu.vector_store %arg8[%c0_30, %c0_31], %2 {strides = array<i32>} : memref<16x128xf32, #tpu.memory_space<vmem>>, vector<16x128xf32>,
    %c0_32 = arith.constant 0 : index
    %c0_33 = arith.constant 0 : index
    %65 = vector.load %arg3[%c0_32, %c0_33] : memref<16x1xf32, #tpu.memory_space<vmem>>, vector<16x1xf32>
    %66 = vector.broadcast %65 : vector<16x1xf32> to vector<16x128xf32>
    %67 = arith.mulf %63, %66 : vector<16x128xf32>
    %c0_34 = arith.constant 0 : index
    %c0_35 = arith.constant 0 : index
    %68 = vector.load %arg6[%c0_34, %c0_35] : memref<1x128xf32, #tpu.memory_space<vmem>>, vector<1x128xf32>
    %69 = vector.broadcast %68 : vector<1x128xf32> to vector<16x128xf32>
    %70 = arith.mulf %67, %69 : vector<16x128xf32>
    %c0_36 = arith.constant 0 : index
    %c0_37 = arith.constant 0 : index
    %71 = vector.load %arg9[%c0_36, %c0_37] : memref<16x128xf32, #tpu.memory_space<vmem>>, vector<16x128xf32>
    tpu.vector_store %arg9[%c0_36, %c0_37], %70 {strides = array<i32>} : memref<16x128xf32, #tpu.memory_space<vmem>>, vector<16x128xf32>,
    return
  }
  func.func @transform_0(%arg0: i32, %arg1: i32) -> (i32, i32) {
    %c0_i32 = arith.constant 0 : i32
    %c0_i32_0 = arith.constant 0 : i32
    return %arg1, %c0_i32 : i32, i32
  }
  func.func @transform_1(%arg0: i32, %arg1: i32) -> (i32, i32) {
    %c0_i32 = arith.constant 0 : i32
    %c0_i32_0 = arith.constant 0 : i32
    return %arg1, %c0_i32 : i32, i32
  }
  func.func @transform_2(%arg0: i32, %arg1: i32) -> (i32, i32) {
    %c0_i32 = arith.constant 0 : i32
    %c0_i32_0 = arith.constant 0 : i32
    return %arg1, %c0_i32 : i32, i32
  }
  func.func @transform_3(%arg0: i32, %arg1: i32) -> (i32, i32) {
    %c0_i32 = arith.constant 0 : i32
    %c0_i32_0 = arith.constant 0 : i32
    return %arg0, %c0_i32 : i32, i32
  }
  func.func @transform_4(%arg0: i32, %arg1: i32) -> (i32, i32) {
    %c0_i32 = arith.constant 0 : i32
    %c0_i32_0 = arith.constant 0 : i32
    return %c0_i32, %arg0 : i32, i32
  }
  func.func @transform_5(%arg0: i32, %arg1: i32) -> (i32, i32) {
    %c0_i32 = arith.constant 0 : i32
    %c0_i32_0 = arith.constant 0 : i32
    return %c0_i32, %arg0 : i32, i32
  }
  func.func @transform_6(%arg0: i32, %arg1: i32) -> (i32, i32) {
    %c0_i32 = arith.constant 0 : i32
    return %arg1, %arg0 : i32, i32
  }
  func.func @transform_7(%arg0: i32, %arg1: i32) -> (i32, i32) {
    %c0_i32 = arith.constant 0 : i32
    return %arg1, %arg0 : i32, i32
  }
}

</mosaic_0001>

<llo_original>
// kernel: tpu_custom_call.1
$region0: #{tpu_custom_call.1}
  #allocation0 [shape = 'u32[]', space=smem, size = 0x4, offset = 0x4, fixed_abs, tag = 'smem constant byte address 0x4 - core index']
  #allocation1 [shape = 'u32[144,128]{1,0:T(1,128)}', space=vmem, size = 0x12000, scoped, tag = 'internal scratch']
  %s0 = inlined_call_operand.vmem [shape: f32[16,32], index: 0, kind: input, shape index: {}]
  %s1 = inlined_call_operand.vmem [shape: f32[16,1], index: 1, kind: input, shape index: {}]
  %s2 = inlined_call_operand.vmem [shape: f32[16,1], index: 2, kind: input, shape index: {}]
  %s3 = inlined_call_operand.vmem [shape: f32[128,32], index: 3, kind: input, shape index: {}]
  %s4 = inlined_call_operand.vmem [shape: f32[1,128], index: 4, kind: input, shape index: {}]
  %s5 = inlined_call_operand.vmem [shape: f32[1,128], index: 5, kind: input, shape index: {}]
  %s6 = inlined_call_operand.hbm [shape: f32[16,128], index: 6, kind: output, shape index: {0}]
  %s7 = inlined_call_operand.hbm [shape: f32[16,128], index: 7, kind: output, shape index: {1}]
  %8 = xla_tuple %s6, %s7
  %s9 = sld [smem:[#allocation0]]
  $region42: #{tpu_custom_call.1} parent=0
    _
  %s11 = ssub.s32 1, %s9
  %s12 = scalar_select 0, %s11, %s9
  $region1: #{tpu_custom_call.1} parent=0
    #allocation2 [shape = 'u8[8192]{0}', space=vmem, size = 0x2000, scoped, tag = 'output window, operand 0, single buffered']
    #allocation3 [shape = 's32[1]{0}', space=sflag, size = 0x4, scoped, tag = 'scoped memory for tpu_custom_call.1']
    #allocation4 [shape = 'u8[8192]{0}', space=vmem, size = 0x2000, scoped, tag = 'output window, operand 1, single buffered']
    #allocation5 [shape = 's32[1]{0}', space=sflag, size = 0x4, scoped, tag = 'scoped memory for tpu_custom_call.1']
    %13 = vsyncpa [#allocation3], 0
    %14 = vsyncpa [#allocation5], 0
    // Predicated region
    $region2: #{tpu_custom_call.1} parent=1 // pred_check
      _
    $region3: #{tpu_custom_call.1} parent=1 // pred_check_branch
      %16 = sbr.rel (0) target = $region5
    $region4: #{tpu_custom_call.1} parent=1 // pred_region
      _
    $region5: #{tpu_custom_call.1} parent=1 // pred_fallthru
      _
    // Predicated region
    $region6: #{tpu_custom_call.1} parent=1 // pred_check
      _
    $region7: #{tpu_custom_call.1} parent=1 // pred_check_branch
      %18 = sbr.rel (0) target = $region9
    $region8: #{tpu_custom_call.1} parent=1 // pred_region
      _
    $region9: #{tpu_custom_call.1} parent=1 // pred_fallthru
      _
    // Predicated region
    $region10: #{tpu_custom_call.1} parent=1 // pred_check
      _
    $region11: #{tpu_custom_call.1} parent=1 // pred_check_branch
      %20 = sbr.rel (0) target = $region13
    $region12: #{tpu_custom_call.1} parent=1 // pred_region
      _
    $region13: #{tpu_custom_call.1} parent=1 // pred_fallthru
      _
    // Predicated region
    $region14: #{tpu_custom_call.1} parent=1 // pred_check
      _
    $region15: #{tpu_custom_call.1} parent=1 // pred_check_branch
      %22 = sbr.rel (0) target = $region17
    $region16: #{tpu_custom_call.1} parent=1 // pred_region
      _
    $region17: #{tpu_custom_call.1} parent=1 // pred_fallthru
      _
    // Predicated region
    $region18: #{tpu_custom_call.1} parent=1 // pred_check
      _
    $region19: #{tpu_custom_call.1} parent=1 // pred_check_branch
      %24 = sbr.rel (0) target = $region21
    $region20: #{tpu_custom_call.1} parent=1 // pred_region
      _
    $region21: #{tpu_custom_call.1} parent=1 // pred_fallthru
      _
    // Predicated region
    $region22: #{tpu_custom_call.1} parent=1 // pred_check
      _
    $region23: #{tpu_custom_call.1} parent=1 // pred_check_branch
      %26 = sbr.rel (0) target = $region25
    $region24: #{tpu_custom_call.1} parent=1 // pred_region
      _
    $region25: #{tpu_custom_call.1} parent=1 // pred_fallthru
      _
    %v27 = vld [vmem:[%s0] sm:$0xff]
    %v28 = vld [vmem:[%s0 + $0x8] sm:$0xff]
    %v29 = vld [vmem:[%s3] sm:$0xff]
    %v30 = vld [vmem:[%s3 + $0x8] sm:$0xff]
    %v31 = vld [vmem:[%s3 + $0x10] sm:$0xff]
    %v32 = vld [vmem:[%s3 + $0x18] sm:$0xff]
    %v33 = vld [vmem:[%s3 + $0x20] sm:$0xff]
    %v34 = vld [vmem:[%s3 + $0x28] sm:$0xff]
    %v35 = vld [vmem:[%s3 + $0x30] sm:$0xff]
    %v36 = vld [vmem:[%s3 + $0x38] sm:$0xff]
    %v37 = vld [vmem:[%s3 + $0x40] sm:$0xff]
    %v38 = vld [vmem:[%s3 + $0x48] sm:$0xff]
    %v39 = vld [vmem:[%s3 + $0x50] sm:$0xff]
    %v40 = vld [vmem:[%s3 + $0x58] sm:$0xff]
    %v41 = vld [vmem:[%s3 + $0x60] sm:$0xff]
    %v42 = vld [vmem:[%s3 + $0x68] sm:$0xff]
    %v43 = vld [vmem:[%s3 + $0x70] sm:$0xff]
    %v44 = vld [vmem:[%s3 + $0x78] sm:$0xff]
    %vm45 = vcmask 261120
    %v47 = vsel %vm45, %v27, 0
    %v50 = vsel %vm45, %v28, 0
    %v53 = vsel %vm45, %v29, 0
    %v56 = vsel %vm45, %v30, 0
    %v59 = vsel %vm45, %v31, 0
    %v62 = vsel %vm45, %v32, 0
    %v65 = vsel %vm45, %v33, 0
    %v68 = vsel %vm45, %v34, 0
    %v71 = vsel %vm45, %v35, 0
    %v74 = vsel %vm45, %v36, 0
    %v77 = vsel %vm45, %v37, 0
    %v80 = vsel %vm45, %v38, 0
    %v83 = vsel %vm45, %v39, 0
    %v86 = vsel %vm45, %v40, 0
    %v89 = vsel %vm45, %v41, 0
    %v92 = vsel %vm45, %v42, 0
    %v95 = vsel %vm45, %v43, 0
    %v98 = vsel %vm45, %v44, 0
    %100 = vmatprep.subr.mxu0 0.0
    %101 = vmatpush1.xpose.msra.mxu0 %v53
    %102 = vmatprep.subr.mxu0 0.0
    %103 = vmatpush1.xpose.msra.mxu0 %v56
    %104 = vmatprep.subr.mxu0 0.0
    %105 = vmatpush1.xpose.msra.mxu0 %v59
    %106 = vmatprep.subr.mxu0 0.0
    %107 = vmatpush1.xpose.msra.mxu0 %v62
    %108 = vmatprep.subr.mxu0 0.0
    %109 = vmatpush1.xpose.msra.mxu0 %v65
    %110 = vmatprep.subr.mxu0 0.0
    %111 = vmatpush1.xpose.msra.mxu0 %v68
    %112 = vmatprep.subr.mxu0 0.0
    %113 = vmatpush1.xpose.msra.mxu0 %v71
    %114 = vmatprep.subr.mxu0 0.0
    %115 = vmatpush1.xpose.msra.mxu0 %v74
    %116 = vmatprep.subr.mxu0 0.0
    %117 = vmatpush1.xpose.msra.mxu0 %v77
    %118 = vmatprep.subr.mxu0 0.0
    %119 = vmatpush1.xpose.msra.mxu0 %v80
    %120 = vmatprep.subr.mxu0 0.0
    %121 = vmatpush1.xpose.msra.mxu0 %v83
    %122 = vmatprep.subr.mxu0 0.0
    %123 = vmatpush1.xpose.msra.mxu0 %v86
    %124 = vmatprep.subr.mxu0 0.0
    %125 = vmatpush1.xpose.msra.mxu0 %v89
    %126 = vmatprep.subr.mxu0 0.0
    %127 = vmatpush1.xpose.msra.mxu0 %v92
    %128 = vmatprep.subr.mxu0 0.0
    %129 = vmatpush1.xpose.msra.mxu0 %v95
    %130 = vmatprep.subr.mxu0 0.0
    %131 = vmatpush1.xpose.msra.mxu0 %v98
    %132 = vmatprep.subr.mxu0 0.0
    %133 = vmatpush1.xpose.msra.mxu0 0.0
    %134 = vmatprep.subr.mxu0 0.0
    %135 = vmatpush1.xpose.msra.mxu0 0.0
    %136 = vmatprep.subr.mxu0 0.0
    %137 = vmatpush1.xpose.msra.mxu0 0.0
    %138 = vmatprep.subr.mxu0 0.0
    %139 = vmatpush1.xpose.msra.mxu0 0.0
    %140 = vmatprep.subr.mxu0 0.0
    %141 = vmatpush1.xpose.msra.mxu0 0.0
    %142 = vmatprep.subr.mxu0 0.0
    %143 = vmatpush1.xpose.msra.mxu0 0.0
    %144 = vmatprep.subr.mxu0 0.0
    %145 = vmatpush1.xpose.msra.mxu0 0.0
    %146 = vmatprep.subr.mxu0 0.0
    %147 = vmatpush1.xpose.msra.mxu0 0.0
    %148 = vmatprep.subr.mxu0 0.0
    %149 = vmatpush1.xpose.msra.mxu0 0.0
    %150 = vmatprep.subr.mxu0 0.0
    %151 = vmatpush1.xpose.msra.mxu0 0.0
    %152 = vmatprep.subr.mxu0 0.0
    %153 = vmatpush1.xpose.msra.mxu0 0.0
    %154 = vmatprep.subr.mxu0 0.0
    %155 = vmatpush1.xpose.msra.mxu0 0.0
    %156 = vmatprep.subr.mxu0 0.0
    %157 = vmatpush1.xpose.msra.mxu0 0.0
    %158 = vmatprep.subr.mxu0 0.0
    %159 = vmatpush1.xpose.msra.mxu0 0.0
    %160 = vmatprep.subr.mxu0 0.0
    %161 = vmatpush1.xpose.msra.mxu0 0.0
    %162 = vmatprep.subr.mxu0 0.0
    %163 = vmatpush1.xpose.msra.mxu0 0.0
    %164 = vmatprep.mubr.f32.mxu0 0.0
    %165 = vmatmul.mubr.f32.gmra.mrb[0].mxu0 %v47
    %v166 = vpop.f32.mrb[0].mxu0
    %v167 = vadd.f32 0.0, %v166
    %v168 = vpop.f32.mrb[0].mxu0
    %169 = vmatprep.mubr.f32.mxu0 0.0
    %170 = vmatmul.mubr.f32.gmra.mrb[0].mxu0 %v50
    %v171 = vpop.f32.mrb[0].mxu0
    %v172 = vadd.f32 0.0, %v171
    %v173 = vpop.f32.mrb[0].mxu0
    %174 = vdwg.mxu0
    %v175 = vld [vmem:[%s2] sm:$0xff]
    %v176 = vld [vmem:[%s2 + $0x8] sm:$0xff]
    %178 = vset.pattern.permute.xlu0 0
    %179 = vperm.xlu0 %178, %v175
    %v180 = vpop.permute.xlu0 %179
    %183 = vset.pattern.permute.xlu0 0
    %184 = vperm.xlu0 %183, %v176
    %v185 = vpop.permute.xlu0 %184
    %v187 = vmul.f32 %v167, %v180
    %v188 = vmul.f32 %v172, %v185
    %v189 = vld [vmem:[%s5] sm:$0x1]
    %v191 = vlaneseq
    %v192 = vshrl.u32 %v191, 7
    %v193 = vsub.s32 0, %v192
    %v194 = vrot.slane %v189, %v193
    %v196 = vmul.f32 %v187, %v194
    %v197 = vmul.f32 %v188, %v194
    %v198 = vmax.f32 %v196, -1.0
    %v199 = vmax.f32 %v197, -1.0
    %v200 = vmin.f32 %v198, 1.0
    %v201 = vmin.f32 %v199, 1.0
    %vm202 = vcmp.le.f32.partialorder %v200, 0.70710677
    %vm203 = vcmp.le.f32.partialorder %v201, 0.70710677
    %v204 = vsel %vm202, 1.0, 0.0
    %v205 = vsel %vm203, 1.0, 0.0
    %v206 = vadd.f32 %v204, 0.0
    %v207 = vadd.f32 %v205, 0.0
    %vm208 = vcmp.le.f32.partialorder %v200, 6.123234e-17
    %vm209 = vcmp.le.f32.partialorder %v201, 6.123234e-17
    %v210 = vsel %vm208, 1.0, 0.0
    %v211 = vsel %vm209, 1.0, 0.0
    %v212 = vadd.f32 %v206, %v210
    %v213 = vadd.f32 %v207, %v211
    %vm214 = vcmp.le.f32.partialorder %v200, -0.70710677
    %vm215 = vcmp.le.f32.partialorder %v201, -0.70710677
    %v216 = vsel %vm214, 1.0, 0.0
    %v217 = vsel %vm215, 1.0, 0.0
    %v218 = vadd.f32 %v212, %v216
    %v219 = vadd.f32 %v213, %v217
    %vm220 = vcmp.le.f32.partialorder %v200, -1.0
    %vm221 = vcmp.le.f32.partialorder %v201, -1.0
    %v222 = vsel %vm220, 1.0, 0.0
    %v223 = vsel %vm221, 1.0, 0.0
    %v224 = vadd.f32 %v218, %v222
    %v225 = vadd.f32 %v219, %v223
    %v226 = vmul.f32 %v224, 0.5
    %v227 = vmul.f32 %v225, 0.5
    %v228 = vfloor.f32 %v226
    %v229 = vfloor.f32 %v227
    %v230 = vsub.f32 %v226, %v228
    %v231 = vsub.f32 %v227, %v229
    %v232 = vmul.f32 %v230, 4.0
    %v233 = vmul.f32 %v231, 4.0
    %v234 = vsub.f32 1.0, %v232
    %v235 = vsub.f32 1.0, %v233
    %v236 = vmul.f32 %v200, %v200
    %v237 = vmul.f32 %v201, %v201
    %v238 = vsub.f32 1.0, %v236
    %v239 = vsub.f32 1.0, %v237
    %v240 = vmul.f32 %v236, %v236
    %v241 = vmul.f32 %v237, %v237
    %v242 = vmul.f32 %v238, %v238
    %v243 = vmul.f32 %v239, %v239
    %v244 = vmul.f32 %v236, %v238
    %v245 = vmul.f32 %v237, %v239
    %v246 = vmul.f32 %v244, -6.0
    %v247 = vmul.f32 %v245, -6.0
    %v248 = vadd.f32 %v240, %v246
    %v249 = vadd.f32 %v241, %v247
    %v250 = vadd.f32 %v248, %v242
    %v251 = vadd.f32 %v249, %v243
    %v252 = vmul.f32 %v234, %v250
    %v253 = vmul.f32 %v235, %v251
    %v254 = vmul.f32 %v224, 2.0
    %v255 = vmul.f32 %v225, 2.0
    %v256 = vsub.f32 %v252, %v254
    %v257 = vsub.f32 %v253, %v255
    %258 = vst [vmem:[#allocation2] sm:$0xff] %v167
    %259 = vst [vmem:[#allocation2 + $0x8] sm:$0xff] %v172
    %v260 = vld [vmem:[%s1] sm:$0xff]
    %v261 = vld [vmem:[%s1 + $0x8] sm:$0xff]
    %263 = vset.pattern.permute.xlu0 0
    %264 = vperm.xlu0 %263, %v260
    %v265 = vpop.permute.xlu0 %264
    %268 = vset.pattern.permute.xlu0 0
    %269 = vperm.xlu0 %268, %v261
    %v270 = vpop.permute.xlu0 %269
    %v272 = vmul.f32 %v256, %v265
    %v273 = vmul.f32 %v257, %v270
    %v274 = vld [vmem:[%s4] sm:$0x1]
    %v276 = vlaneseq
    %v277 = vshrl.u32 %v276, 7
    %v278 = vsub.s32 0, %v277
    %v279 = vrot.slane %v274, %v278
    %v281 = vmul.f32 %v272, %v279
    %v282 = vmul.f32 %v273, %v279
    %283 = vst [vmem:[#allocation4] sm:$0xff] %v281
    %284 = vst [vmem:[#allocation4 + $0x8] sm:$0xff] %v282
    // Predicated region
    $region26: #{tpu_custom_call.1} parent=1 // pred_check
      _
    $region27: #{tpu_custom_call.1} parent=1 // pred_check_branch
      %286 = sbr.rel (0) target = $region29
    $region28: #{tpu_custom_call.1} parent=1 // pred_region
      %s288 = ssub.s32 256, 256
      %289 = vsyncadd [#allocation3], %s288
      %s290 = sshll.u32 [#allocation2], 4
      %s291 = int_to_ptr.vmem [resolvable:$true] %s290
      %296 = dma.vmem_to_hbm [thread:$0]  %s291, 256, %s6, [#allocation3], 128, 128, 8
    $region29: #{tpu_custom_call.1} parent=1 // pred_fallthru
      _
    // Predicated region
    $region30: #{tpu_custom_call.1} parent=1 // pred_check
      _
    $region31: #{tpu_custom_call.1} parent=1 // pred_check_branch
      %298 = sbr.rel (0) target = $region33
    $region32: #{tpu_custom_call.1} parent=1 // pred_region
      %s300 = ssub.s32 256, 256
      %301 = vsyncadd [#allocation5], %s300
      %s302 = sshll.u32 [#allocation4], 4
      %s303 = int_to_ptr.vmem [resolvable:$true] %s302
      %308 = dma.vmem_to_hbm [thread:$0]  %s303, 256, %s7, [#allocation5], 128, 128, 8
    $region33: #{tpu_custom_call.1} parent=1 // pred_fallthru
      _
    // Predicated region
    $region34: #{tpu_custom_call.1} parent=1 // pred_check
      _
    $region35: #{tpu_custom_call.1} parent=1 // pred_check_branch
      %310 = sbr.rel (0) target = $region37
    $region36: #{tpu_custom_call.1} parent=1 // pred_region
      %311 = dma.done [#allocation3], 256
    $region37: #{tpu_custom_call.1} parent=1 // pred_fallthru
      _
    // Predicated region
    $region38: #{tpu_custom_call.1} parent=1 // pred_check
      _
    $region39: #{tpu_custom_call.1} parent=1 // pred_check_branch
      %313 = sbr.rel (0) target = $region41
    $region40: #{tpu_custom_call.1} parent=1 // pred_region
      %314 = dma.done [#allocation5], 256
    $region41: #{tpu_custom_call.1} parent=1 // pred_fallthru
      _
    %315 = vsyncpa [#allocation3], 1
    %316 = vsyncpa [#allocation5], 1

</llo_original>
